<compile_context>
chip_gen: v6e
topology: v6e:2x2x1
jax: 0.10.0
libtpu: 0.0.40
codegen_flags: <defaults>
</compile_context>

<pallas_src>
import math

import jax
import jax.numpy as jnp
from jax.experimental import pallas as pl
from jax.experimental.pallas import tpu as pltpu


_VMEM_TILE_BUDGET = 32 * 1024 * 1024  # bytes the pipelined tiles may occupy


# ----------------------------------------------------------------------------
# Kernels
# ----------------------------------------------------------------------------
def _make_project_first_kernel():
    """output += adj_k @ (x_k @ W); bias folded into the k == 0 init."""

    def kernel(x_ref, adj_ref, w_ref, b_ref, o_ref):
        k = pl.program_id(1)

        @pl.when(k == 0)
        def _init():
            # The (Bt, N, Fout_pad) output block is resident across the k axis:
            # start the f32 accumulator at the (broadcast) bias.
            o_ref[...] = jnp.broadcast_to(
                b_ref[...].astype(o_ref.dtype), o_ref.shape)

        # Projection for this node tile: (Bt, Kt, Fin) @ (Fin, Fout_pad).
        support = jax.lax.dot_general(
            x_ref[...], w_ref[...],
            dimension_numbers=(((2,), (0,)), ((), ())),
            preferred_element_type=jnp.float32,
        )
        # Aggregation: batched (Bt, N, Kt) @ (Bt, Kt, Fout_pad); contraction on
        # adj's last axis -- transpose-free MXU feed, f32 accumulation.
        o_ref[...] += jax.lax.dot_general(
            adj_ref[...], support.astype(adj_ref.dtype),
            dimension_numbers=(((2,), (1,)), ((0,), (0,))),
            preferred_element_type=jnp.float32,
        )

    return kernel


def _make_aggregate_first_kernel():
    """acc += adj_k @ x_k (carries the narrow Fin width); project + bias last."""

    def kernel(x_ref, adj_ref, w_ref, b_ref, o_ref, acc_ref):
        k = pl.program_id(1)

        @pl.when(k == 0)
        def _init():
            acc_ref[...] = jnp.zeros_like(acc_ref)

        # Aggregation: batched (Bt, N, Kt) @ (Bt, Kt, Fin) -> (Bt, N, Fin).
        acc_ref[...] += jax.lax.dot_general(
            adj_ref[...], x_ref[...],
            dimension_numbers=(((2,), (1,)), ((0,), (0,))),
            preferred_element_type=jnp.float32,
        )

        @pl.when(k == pl.num_programs(1) - 1)
        def _finalize():
            out = jax.lax.dot_general(
                acc_ref[...].astype(w_ref.dtype), w_ref[...],
                dimension_numbers=(((2,), (0,)), ((), ())),
                preferred_element_type=jnp.float32,
            )
            o_ref[...] = (out + b_ref[...].astype(jnp.float32)).astype(o_ref.dtype)

    return kernel


# ----------------------------------------------------------------------------
# Tile sizing heuristics
# ----------------------------------------------------------------------------
def _tile_bytes(bt, kt, n, fin, fout_pad, itemsize, acc_width):
    x_blk = bt * kt * fin * itemsize
    adj_blk = bt * n * kt * itemsize
    out_blk = bt * n * fout_pad * 4            # f32 output block
    acc_blk = bt * n * acc_width * 4           # f32 scratch accumulator (0 if unused)
    wb_blk = (fin + 1) * fout_pad * itemsize   # single-buffered weight + bias
    # x / adj / out blocks are double-buffered by the pipeline.
    return 2 * (x_blk + adj_blk + out_blk) + acc_blk + wb_blk


def _pick_batch_tile(B, N, Fin, Fout_pad, itemsize, acc_width,
                     target_rows=1024, vmem_budget=_VMEM_TILE_BUDGET):
    """Largest divisor of B with Bt*N ~ target_rows whose tiles fit VMEM.

    The ">= 2 grid steps" clamp is only applied when each half is real MXU
    work (v7x megacore); on tiny problems (and on single-TC v5e/v6e) the whole
    batch collapses into one grid step.
    """
    want = max(1, target_rows // max(N, 1))
    flops_if_split = (2.0 * N * N * min(Fin, Fout_pad)
                      + 2.0 * N * Fin * Fout_pad) * (B / 2.0)
    if B >= 2 and flops_if_split >= 1e8:
        want = min(want, max(1, B // 2))
    bt = 1
    for d in range(1, B + 1):
        if (B % d == 0 and d <= want and
                _tile_bytes(d, N, N, Fin, Fout_pad, itemsize, acc_width)
                <= vmem_budget):
            bt = d
    return bt


def _pick_k_tile(N, Bt, Fin, Fout_pad, itemsize, acc_width,
                 vmem_budget=_VMEM_TILE_BUDGET):
    """Tile of adj's contraction axis: N when it fits, otherwise the largest
    128-multiple divisor of N whose blocks fit the VMEM budget."""
    if _tile_bytes(Bt, N, N, Fin, Fout_pad, itemsize, acc_width) <= vmem_budget:
        return N
    best = None
    kt = 128
    while kt < N:
        if (N % kt == 0 and
                _tile_bytes(Bt, kt, N, Fin, Fout_pad, itemsize, acc_width)
                <= vmem_budget):
            best = kt
        kt += 128
    return best if best is not None else N


# ----------------------------------------------------------------------------
# Wrapper
# ----------------------------------------------------------------------------
def graph_convolution(inputs, adj, weight, bias=None, compute_dtype=jnp.float32):
    """GCN forward.  inputs: (B, N, Fin), adj: (B, N, N), weight: (Fin, Fout),
    bias: (Fout,) or None.  Returns (B, N, Fout) float32.

    compute_dtype=jnp.bfloat16 halves HBM traffic on the adjacency stream while
    keeping f32 MXU accumulation (loosen test tolerance if enabled)."""
    B, N, Fin = inputs.shape
    Fin_w, Fout = weight.shape
    assert Fin_w == Fin, "weight must be (Fin, Fout)"

    # Lane-dense output: pad Fout up to a multiple of 128; the zero columns are
    # free MXU work and are sliced off after the call.
    Fout_pad = ((Fout + 127) // 128) * 128

    if bias is None:
        bias = jnp.zeros((Fout,), dtype=jnp.float32)
    bias_p = jnp.pad(bias.astype(jnp.float32),
                     (0, Fout_pad - Fout)).reshape(1, Fout_pad)
    weight_p = jnp.pad(weight, ((0, 0), (0, Fout_pad - Fout)))

    # Optional low-precision MXU inputs; accumulation stays f32.
    x_in = inputs.astype(compute_dtype)
    adj_in = adj.astype(compute_dtype)
    w_in = weight_p.astype(compute_dtype)
    itemsize = jnp.dtype(compute_dtype).itemsize

    # Matmul order: carry the narrower feature width through the N^2 matmul.
    project_first = Fin >= Fout
    acc_width = 0 if project_first else Fin

    Bt = _pick_batch_tile(B, N, Fin, Fout_pad, itemsize, acc_width)
    Kt = _pick_k_tile(N, Bt, Fin, Fout_pad, itemsize, acc_width)
    grid = (B // Bt, N // Kt)

    kernel = (_make_project_first_kernel() if project_first
              else _make_aggregate_first_kernel())
    scratch_shapes = ([] if project_first
                      else [pltpu.VMEM((Bt, N, Fin), jnp.float32)])

    footprint = _tile_bytes(Bt, Kt, N, Fin, Fout_pad, itemsize, acc_width)
    vmem_limit = int(min(max(2 * footprint, 32 << 20), 64 << 20))

    def run(single_buffer_params):
        # Grid-invariant weight/bias: single-buffer them to save VMEM.
        wb_kwargs = (dict(pipeline_mode=pl.Buffered(1))
                     if single_buffer_params else {})
        in_specs = [
            pl.BlockSpec((Bt, Kt, Fin), lambda b, k: (b, k, 0)),   # inputs tile
            pl.BlockSpec((Bt, N, Kt), lambda b, k: (b, 0, k)),     # adjacency tile
            pl.BlockSpec((Fin, Fout_pad), lambda b, k: (0, 0), **wb_kwargs),  # weight
            pl.BlockSpec((1, Fout_pad), lambda b, k: (0, 0), **wb_kwargs),    # bias
        ]
        out_specs = pl.BlockSpec((Bt, N, Fout_pad), lambda b, k: (b, 0, 0))
        return pl.pallas_call(
            kernel,
            out_shape=jax.ShapeDtypeStruct((B, N, Fout_pad), jnp.float32),
            grid=grid,
            in_specs=in_specs,
            out_specs=out_specs,
            scratch_shapes=scratch_shapes,
            compiler_params=pltpu.CompilerParams(
                dimension_semantics=("parallel", "arbitrary"),
                vmem_limit_bytes=vmem_limit),
        )(x_in, adj_in, w_in, bias_p)

    try:
        out = run(True)
        jax.block_until_ready(out)      # surface any async compile error here
    except Exception:                   # conservative fallback: default buffering
        out = run(False)

    return out[..., :Fout]


# ----------------------------------------------------------------------------
# Reference + self-test
# ----------------------------------------------------------------------------
def reference_forward(inputs, adj, weight, bias):
    support = jnp.einsum("bnf,fo->bno", inputs, weight)
    out = jnp.einsum("bnm,bmo->bno", adj, support)
    return out + bias.reshape(1, 1, -1)


def _run_case(key, B, N, Fin, Fout):
    kx, kadj, kw, kb = jax.random.split(key, 4)
    x = jax.random.normal(kx, (B, N, Fin), dtype=jnp.float32)

    # Random binary adjacency with self-loops, row-normalized (typical GCN
    # preprocessing; any dense adjacency works for the kernel).
    adj = (jax.random.uniform(kadj, (B, N, N)) > 0.5).astype(jnp.float32)
    adj = jnp.maximum(adj, jnp.eye(N, dtype=jnp.float32)[None])
    adj = adj / jnp.sum(adj, axis=-1, keepdims=True)

    std = 0.02 * math.sqrt(2.0 / (Fin + Fout))   # xavier-normal-like, gain=0.02
    weight = std * jax.random.normal(kw, (Fin, Fout), dtype=jnp.float32)
    bias = 0.1 * jax.random.normal(kb, (Fout,), dtype=jnp.float32)

    out = graph_convolution(x, adj, weight, bias)
    out = jax.block_until_ready(out)

    ref = reference_forward(x, adj, weight, bias)
    assert out.shape == (B, N, Fout)
    assert jnp.allclose(out, ref, atol=1e-5, rtol=1e-5), (
        f"mismatch vs reference (B={B}, N={N}, Fin={Fin}, Fout={Fout})")


if __name__ == "__main__":
    key = jax.random.PRNGKey(0)
    k1, k2 = jax.random.split(key)
    _run_case(k1, 2, 8, 32, 32)   # Fin >= Fout -> project-then-aggregate path
    _run_case(k2, 2, 8, 16, 64)   # Fin <  Fout -> aggregate-then-project path
    print("KERNEL_OK")
</pallas_src>

<mosaic_0001>
module attributes {stable_mosaic.version = 11 : i64} {
  func.func @kernel(%arg0: i32, %arg1: i32, %arg2: memref<2x8x32xf32, #tpu.memory_space<vmem>>, %arg3: memref<2x8x8xf32, #tpu.memory_space<vmem>>, %arg4: memref<32x128xf32, #tpu.memory_space<vmem>>, %arg5: memref<1x128xf32, #tpu.memory_space<vmem>>, %arg6: memref<2x8x128xf32, #tpu.memory_space<vmem>>) attributes {dimension_semantics = [#tpu.dimension_semantics<parallel>, #tpu.dimension_semantics<arbitrary>], iteration_bounds = array<i64: 1, 1>, scalar_prefetch = 0 : i64, scratch_operands = 0 : i64, tpu.core_type = #tpu.core_type<tc>, window_params = [{transform_indices = @transform_0, window_bounds = array<i64: 2, 8, 32>}, {transform_indices = @transform_1, window_bounds = array<i64: 2, 8, 8>}, {pipeline_mode = #tpu.pipeline_mode<synchronous>, transform_indices = @transform_2, window_bounds = array<i64: 32, 128>}, {pipeline_mode = #tpu.pipeline_mode<synchronous>, transform_indices = @transform_3, window_bounds = array<i64: 1, 128>}, {transform_indices = @transform_4, window_bounds = array<i64: 2, 8, 128>}]} {
    %c0_i32 = arith.constant 0 : i32
    %0 = arith.cmpi eq, %arg1, %c0_i32 : i32
    %1 = arith.extui %0 : i1 to i32
    %c0_i32_0 = arith.constant 0 : i32
    %2 = arith.cmpi ne, %1, %c0_i32_0 : i32
    scf.if %2 {
      %c0_15 = arith.constant 0 : index
      %c0_16 = arith.constant 0 : index
      %11 = vector.load %arg5[%c0_15, %c0_16] : memref<1x128xf32, #tpu.memory_space<vmem>>, vector<1x128xf32>
      %12 = vector.shape_cast %11 : vector<1x128xf32> to vector<1x1x128xf32>
      %13 = vector.broadcast %12 : vector<1x1x128xf32> to vector<2x8x128xf32>
      %c0_17 = arith.constant 0 : index
      %c0_18 = arith.constant 0 : index
      %c0_19 = arith.constant 0 : index
      %14 = vector.load %arg6[%c0_17, %c0_18, %c0_19] : memref<2x8x128xf32, #tpu.memory_space<vmem>>, vector<2x8x128xf32>
      tpu.vector_store %arg6[%c0_17, %c0_18, %c0_19], %13 {strides = array<i32>} : memref<2x8x128xf32, #tpu.memory_space<vmem>>, vector<2x8x128xf32>,
    } else {
    }
    %c0 = arith.constant 0 : index
    %c0_1 = arith.constant 0 : index
    %c0_2 = arith.constant 0 : index
    %3 = vector.load %arg2[%c0, %c0_1, %c0_2] : memref<2x8x32xf32, #tpu.memory_space<vmem>>, vector<2x8x32xf32>
    %c0_3 = arith.constant 0 : index
    %c0_4 = arith.constant 0 : index
    %4 = vector.load %arg4[%c0_3, %c0_4] : memref<32x128xf32, #tpu.memory_space<vmem>>, vector<32x128xf32>
    %cst = arith.constant dense<0.000000e+00> : vector<2x8x128xf32>
    %5 = tpu.matmul %3, %4, %cst {dimension_numbers = #tpu.dot_dimension_numbers<[2], [0], [0, 1], [1], [0, 0, 0, 1, 1, 1], [], []>} : vector<2x8x32xf32>, vector<32x128xf32>, vector<2x8x128xf32> -> vector<2x8x128xf32>
    %c0_5 = arith.constant 0 : index
    %c0_6 = arith.constant 0 : index
    %c0_7 = arith.constant 0 : index
    %6 = vector.load %arg6[%c0_5, %c0_6, %c0_7] : memref<2x8x128xf32, #tpu.memory_space<vmem>>, vector<2x8x128xf32>
    %c0_8 = arith.constant 0 : index
    %c0_9 = arith.constant 0 : index
    %c0_10 = arith.constant 0 : index
    %7 = vector.load %arg3[%c0_8, %c0_9, %c0_10] : memref<2x8x8xf32, #tpu.memory_space<vmem>>, vector<2x8x8xf32>
    %cst_11 = arith.constant dense<0.000000e+00> : vector<2x8x128xf32>
    %8 = tpu.matmul %7, %5, %cst_11 {dimension_numbers = #tpu.dot_dimension_numbers<[2], [1], [1], [2], [0, 0, 0, 1, 1, 2], [0], [0]>} : vector<2x8x8xf32>, vector<2x8x128xf32>, vector<2x8x128xf32> -> vector<2x8x128xf32>
    %9 = arith.addf %6, %8 : vector<2x8x128xf32>
    %c0_12 = arith.constant 0 : index
    %c0_13 = arith.constant 0 : index
    %c0_14 = arith.constant 0 : index
    %10 = vector.load %arg6[%c0_12, %c0_13, %c0_14] : memref<2x8x128xf32, #tpu.memory_space<vmem>>, vector<2x8x128xf32>
    tpu.vector_store %arg6[%c0_12, %c0_13, %c0_14], %9 {strides = array<i32>} : memref<2x8x128xf32, #tpu.memory_space<vmem>>, vector<2x8x128xf32>,
    return
  }
  func.func @transform_0(%arg0: i32, %arg1: i32) -> (i32, i32, i32) {
    %c0_i32 = arith.constant 0 : i32
    %c0_i32_0 = arith.constant 0 : i32
    return %arg0, %arg1, %c0_i32 : i32, i32, i32
  }
  func.func @transform_1(%arg0: i32, %arg1: i32) -> (i32, i32, i32) {
    %c0_i32 = arith.constant 0 : i32
    %c0_i32_0 = arith.constant 0 : i32
    return %arg0, %c0_i32, %arg1 : i32, i32, i32
  }
  func.func @transform_2(%arg0: i32, %arg1: i32) -> (i32, i32) {
    %c0_i32 = arith.constant 0 : i32
    %c0_i32_0 = arith.constant 0 : i32
    %c0_i32_1 = arith.constant 0 : i32
    return %c0_i32, %c0_i32_0 : i32, i32
  }
  func.func @transform_3(%arg0: i32, %arg1: i32) -> (i32, i32) {
    %c0_i32 = arith.constant 0 : i32
    %c0_i32_0 = arith.constant 0 : i32
    %c0_i32_1 = arith.constant 0 : i32
    return %c0_i32, %c0_i32_0 : i32, i32
  }
  func.func @transform_4(%arg0: i32, %arg1: i32) -> (i32, i32, i32) {
    %c0_i32 = arith.constant 0 : i32
    %c0_i32_0 = arith.constant 0 : i32
    %c0_i32_1 = arith.constant 0 : i32
    return %arg0, %c0_i32, %c0_i32_0 : i32, i32, i32
  }
}

module attributes {stable_mosaic.version = 11 : i64} {
  func.func @kernel(%arg0: i32, %arg1: i32, %arg2: memref<2x8x32xf32, #tpu.memory_space<vmem>>, %arg3: memref<2x8x8xf32, #tpu.memory_space<vmem>>, %arg4: memref<32x128xf32, #tpu.memory_space<vmem>>, %arg5: memref<1x128xf32, #tpu.memory_space<vmem>>, %arg6: memref<2x8x128xf32, #tpu.memory_space<vmem>>) attributes {dimension_semantics = [#tpu.dimension_semantics<parallel>, #tpu.dimension_semantics<arbitrary>], iteration_bounds = array<i64: 1, 1>, scalar_prefetch = 0 : i64, scratch_operands = 0 : i64, tpu.core_type = #tpu.core_type<tc>, window_params = [{transform_indices = @transform_0, window_bounds = array<i64: 2, 8, 32>}, {transform_indices = @transform_1, window_bounds = array<i64: 2, 8, 8>}, {pipeline_mode = #tpu.pipeline_mode<synchronous>, transform_indices = @transform_2, window_bounds = array<i64: 32, 128>}, {pipeline_mode = #tpu.pipeline_mode<synchronous>, transform_indices = @transform_3, window_bounds = array<i64: 1, 128>}, {transform_indices = @transform_4, window_bounds = array<i64: 2, 8, 128>}]} {
    %c0_i32 = arith.constant 0 : i32
    %0 = arith.cmpi eq, %arg1, %c0_i32 : i32
    %1 = arith.extui %0 : i1 to i32
    %c0_i32_0 = arith.constant 0 : i32
    %2 = arith.cmpi ne, %1, %c0_i32_0 : i32
    scf.if %2 {
      %c0_15 = arith.constant 0 : index
      %c0_16 = arith.constant 0 : index
      %11 = vector.load %arg5[%c0_15, %c0_16] : memref<1x128xf32, #tpu.memory_space<vmem>>, vector<1x128xf32>
      %12 = vector.shape_cast %11 : vector<1x128xf32> to vector<1x1x128xf32>
      %13 = vector.broadcast %12 : vector<1x1x128xf32> to vector<2x8x128xf32>
      %c0_17 = arith.constant 0 : index
      %c0_18 = arith.constant 0 : index
      %c0_19 = arith.constant 0 : index
      %14 = vector.load %arg6[%c0_17, %c0_18, %c0_19] : memref<2x8x128xf32, #tpu.memory_space<vmem>>, vector<2x8x128xf32>
      tpu.vector_store %arg6[%c0_17, %c0_18, %c0_19], %13 {strides = array<i32>} : memref<2x8x128xf32, #tpu.memory_space<vmem>>, vector<2x8x128xf32>,
    } else {
    }
    %c0 = arith.constant 0 : index
    %c0_1 = arith.constant 0 : index
    %c0_2 = arith.constant 0 : index
    %3 = vector.load %arg2[%c0, %c0_1, %c0_2] : memref<2x8x32xf32, #tpu.memory_space<vmem>>, vector<2x8x32xf32>
    %c0_3 = arith.constant 0 : index
    %c0_4 = arith.constant 0 : index
    %4 = vector.load %arg4[%c0_3, %c0_4] : memref<32x128xf32, #tpu.memory_space<vmem>>, vector<32x128xf32>
    %cst = arith.constant dense<0.000000e+00> : vector<2x8x128xf32>
    %5 = tpu.matmul %3, %4, %cst {dimension_numbers = #tpu.dot_dimension_numbers<[2], [0], [0, 1], [1], [0, 0, 0, 1, 1, 1], [], []>} : vector<2x8x32xf32>, vector<32x128xf32>, vector<2x8x128xf32> -> vector<2x8x128xf32>
    %c0_5 = arith.constant 0 : index
    %c0_6 = arith.constant 0 : index
    %c0_7 = arith.constant 0 : index
    %6 = vector.load %arg6[%c0_5, %c0_6, %c0_7] : memref<2x8x128xf32, #tpu.memory_space<vmem>>, vector<2x8x128xf32>
    %c0_8 = arith.constant 0 : index
    %c0_9 = arith.constant 0 : index
    %c0_10 = arith.constant 0 : index
    %7 = vector.load %arg3[%c0_8, %c0_9, %c0_10] : memref<2x8x8xf32, #tpu.memory_space<vmem>>, vector<2x8x8xf32>
    %cst_11 = arith.constant dense<0.000000e+00> : vector<2x8x128xf32>
    %8 = tpu.matmul %7, %5, %cst_11 {dimension_numbers = #tpu.dot_dimension_numbers<[2], [1], [1], [2], [0, 0, 0, 1, 1, 2], [0], [0]>} : vector<2x8x8xf32>, vector<2x8x128xf32>, vector<2x8x128xf32> -> vector<2x8x128xf32>
    %9 = arith.addf %6, %8 : vector<2x8x128xf32>
    %c0_12 = arith.constant 0 : index
    %c0_13 = arith.constant 0 : index
    %c0_14 = arith.constant 0 : index
    %10 = vector.load %arg6[%c0_12, %c0_13, %c0_14] : memref<2x8x128xf32, #tpu.memory_space<vmem>>, vector<2x8x128xf32>
    tpu.vector_store %arg6[%c0_12, %c0_13, %c0_14], %9 {strides = array<i32>} : memref<2x8x128xf32, #tpu.memory_space<vmem>>, vector<2x8x128xf32>,
    return
  }
  func.func @transform_0(%arg0: i32, %arg1: i32) -> (i32, i32, i32) {
    %c0_i32 = arith.constant 0 : i32
    %c0_i32_0 = arith.constant 0 : i32
    return %arg0, %arg1, %c0_i32 : i32, i32, i32
  }
  func.func @transform_1(%arg0: i32, %arg1: i32) -> (i32, i32, i32) {
    %c0_i32 = arith.constant 0 : i32
    %c0_i32_0 = arith.constant 0 : i32
    return %arg0, %c0_i32, %arg1 : i32, i32, i32
  }
  func.func @transform_2(%arg0: i32, %arg1: i32) -> (i32, i32) {
    %c0_i32 = arith.constant 0 : i32
    %c0_i32_0 = arith.constant 0 : i32
    %c0_i32_1 = arith.constant 0 : i32
    return %c0_i32, %c0_i32_0 : i32, i32
  }
  func.func @transform_3(%arg0: i32, %arg1: i32) -> (i32, i32) {
    %c0_i32 = arith.constant 0 : i32
    %c0_i32_0 = arith.constant 0 : i32
    %c0_i32_1 = arith.constant 0 : i32
    return %c0_i32, %c0_i32_0 : i32, i32
  }
  func.func @transform_4(%arg0: i32, %arg1: i32) -> (i32, i32, i32) {
    %c0_i32 = arith.constant 0 : i32
    %c0_i32_0 = arith.constant 0 : i32
    %c0_i32_1 = arith.constant 0 : i32
    return %arg0, %c0_i32, %c0_i32_0 : i32, i32, i32
  }
}

</mosaic_0001>

<llo_original>
// kernel: tpu_custom_call.1
$region0: #{tpu_custom_call.1}
  #allocation0 [shape = 'u32[]', space=smem, size = 0x4, offset = 0x4, fixed_abs, tag = 'smem constant byte address 0x4 - core index']
  #allocation1 [shape = 'u32[144,128]{1,0:T(1,128)}', space=vmem, size = 0x12000, scoped, tag = 'internal scratch']
  %s0 = inlined_call_operand.hbm [shape: f32[2,8,32], index: 0, kind: input, shape index: {}]
  %s1 = inlined_call_operand.hbm [shape: f32[2,8,8], index: 1, kind: input, shape index: {}]
  %s2 = inlined_call_operand.hbm [shape: f32[32,128], index: 2, kind: input, shape index: {}]
  %s3 = inlined_call_operand.vmem [shape: f32[1,128], index: 3, kind: input, shape index: {}]
  %s4 = inlined_call_operand.hbm [shape: f32[2,8,128], index: 4, kind: output, shape index: {}]
  %s5 = sld [smem:[#allocation0]]
  $region42: #{tpu_custom_call.1} parent=0
    _
  %s7 = ssub.s32 1, %s5
  %s8 = scalar_select 0, %s7, %s5
  $region1: #{tpu_custom_call.1} parent=0
    #allocation2 [shape = 'u8[8192]{0}', space=vmem, size = 0x2000, scoped, tag = 'input window, operand 0, single buffered']
    #allocation3 [shape = 's32[1]{0}', space=sflag, size = 0x4, scoped, tag = 'scoped memory for tpu_custom_call.1']
    #allocation4 [shape = 's32[1]{0}', space=sflag, size = 0x4, scoped, tag = 'scoped memory for tpu_custom_call.1']
    #allocation5 [shape = 'u8[8192]{0}', space=vmem, size = 0x2000, scoped, tag = 'input window, operand 1, single buffered']
    #allocation6 [shape = 's32[1]{0}', space=sflag, size = 0x4, scoped, tag = 'scoped memory for tpu_custom_call.1']
    #allocation7 [shape = 'u8[16384]{0}', space=vmem, size = 0x4000, scoped, tag = 'input window, operand 2, single buffered']
    #allocation8 [shape = 'u8[8192]{0}', space=vmem, size = 0x2000, scoped, tag = 'output window, operand 0, single buffered']
    %9 = vsyncpa [#allocation3], 0
    %10 = vsyncpa [#allocation6], 0
    %11 = vsyncpa [#allocation4], 0
    // Predicated region
    $region2: #{tpu_custom_call.1} parent=1 // pred_check
      _
    $region3: #{tpu_custom_call.1} parent=1 // pred_check_branch
      %13 = sbr.rel (0) target = $region5
    $region4: #{tpu_custom_call.1} parent=1 // pred_region
      %s15 = ssub.s32 256, 256
      %16 = vsyncadd [#allocation3], %s15
      %s17 = sshll.u32 [#allocation2], 4
      %s18 = int_to_ptr.vmem [resolvable:$true] %s17
      %23 = dma.hbm_to_vmem [thread:$0]  %s0, 256, %s18, [#allocation3], 128, 128, 8
    $region5: #{tpu_custom_call.1} parent=1 // pred_fallthru
      _
    // Predicated region
    $region6: #{tpu_custom_call.1} parent=1 // pred_check
      _
    $region7: #{tpu_custom_call.1} parent=1 // pred_check_branch
      %25 = sbr.rel (0) target = $region9
    $region8: #{tpu_custom_call.1} parent=1 // pred_region
      %s27 = ssub.s32 256, 256
      %28 = vsyncadd [#allocation6], %s27
      %s29 = sshll.u32 [#allocation5], 4
      %s30 = int_to_ptr.vmem [resolvable:$true] %s29
      %35 = dma.hbm_to_vmem [thread:$0]  %s1, 256, %s30, [#allocation6], 128, 128, 8
    $region9: #{tpu_custom_call.1} parent=1 // pred_fallthru
      _
    // Predicated region
    $region10: #{tpu_custom_call.1} parent=1 // pred_check
      _
    $region11: #{tpu_custom_call.1} parent=1 // pred_check_branch
      %37 = sbr.rel (0) target = $region13
    $region12: #{tpu_custom_call.1} parent=1 // pred_region
      %s39 = ssub.s32 512, 512
      %40 = vsyncadd [#allocation6], %s39
      %s41 = sshll.u32 [#allocation7], 4
      %s42 = int_to_ptr.vmem [resolvable:$true] %s41
      %47 = dma.hbm_to_vmem [thread:$0]  %s2, 512, %s42, [#allocation6], 128, 128, 8
    $region13: #{tpu_custom_call.1} parent=1 // pred_fallthru
      _
    // Predicated region
    $region14: #{tpu_custom_call.1} parent=1 // pred_check
      _
    $region15: #{tpu_custom_call.1} parent=1 // pred_check_branch
      %49 = sbr.rel (0) target = $region17
    $region16: #{tpu_custom_call.1} parent=1 // pred_region
      _
    $region17: #{tpu_custom_call.1} parent=1 // pred_fallthru
      _
    // Predicated region
    $region18: #{tpu_custom_call.1} parent=1 // pred_check
      _
    $region19: #{tpu_custom_call.1} parent=1 // pred_check_branch
      %51 = sbr.rel (0) target = $region21
    $region20: #{tpu_custom_call.1} parent=1 // pred_region
      %52 = dma.done [#allocation3], 256
    $region21: #{tpu_custom_call.1} parent=1 // pred_fallthru
      _
    // Predicated region
    $region22: #{tpu_custom_call.1} parent=1 // pred_check
      _
    $region23: #{tpu_custom_call.1} parent=1 // pred_check_branch
      %54 = sbr.rel (0) target = $region25
    $region24: #{tpu_custom_call.1} parent=1 // pred_region
      %55 = dma.done [#allocation6], 256
    $region25: #{tpu_custom_call.1} parent=1 // pred_fallthru
      _
    // Predicated region
    $region26: #{tpu_custom_call.1} parent=1 // pred_check
      _
    $region27: #{tpu_custom_call.1} parent=1 // pred_check_branch
      %57 = sbr.rel (0) target = $region29
    $region28: #{tpu_custom_call.1} parent=1 // pred_region
      %58 = dma.done [#allocation6], 512
    $region29: #{tpu_custom_call.1} parent=1 // pred_fallthru
      _
    %p59 = scmp.eq.s32.totalorder 0, 0
    // Predicated region
    $region30: #{tpu_custom_call.1} parent=1 // pred_check
      %p60 = pneg %p59
    $region31: #{tpu_custom_call.1} parent=1 // pred_check_branch
      %62 = sbr.rel (%p60) target = $region33
    $region32: #{tpu_custom_call.1} parent=1 // pred_region
      %v63 = vld [vmem:[%s3] sm:$0x1]
      %v65 = vlaneseq
      %v66 = vshrl.u32 %v65, 7
      %v67 = vsub.s32 0, %v66
      %v68 = vrot.slane %v63, %v67
      %70 = vst [vmem:[#allocation8] sm:$0xff] %v68
      %71 = vst [vmem:[#allocation8 + $0x8] sm:$0xff] %v68
    $region33: #{tpu_custom_call.1} parent=1 // pred_fallthru
      _
    %v72 = vld [vmem:[#allocation2] sm:$0xff]
    %v73 = vld [vmem:[#allocation2 + $0x8] sm:$0xff]
    %v74 = vld [vmem:[#allocation7] sm:$0xff]
    %v75 = vld [vmem:[#allocation7 + $0x8] sm:$0xff]
    %v76 = vld [vmem:[#allocation7 + $0x10] sm:$0xff]
    %v77 = vld [vmem:[#allocation7 + $0x18] sm:$0xff]
    %vm78 = vcmask 261120
    %v80 = vsel %vm78, %v72, 0
    %v83 = vsel %vm78, %v73, 0
    %85 = vmatprep.subr.mxu0 0.0
    %86 = vmatpush1.msra.mxu0 0.0
    %87 = vmatprep.subr.mxu0 0.0
    %88 = vmatpush1.msra.mxu0 0.0
    %89 = vmatprep.subr.mxu0 0.0
    %90 = vmatpush1.msra.mxu0 0.0
    %91 = vmatprep.subr.mxu0 0.0
    %92 = vmatpush1.msra.mxu0 0.0
    %93 = vmatprep.subr.mxu0 0.0
    %94 = vmatpush1.msra.mxu0 0.0
    %95 = vmatprep.subr.mxu0 0.0
    %96 = vmatpush1.msra.mxu0 0.0
    %97 = vmatprep.subr.mxu0 0.0
    %98 = vmatpush1.msra.mxu0 0.0
    %99 = vmatprep.subr.mxu0 0.0
    %100 = vmatpush1.msra.mxu0 0.0
    %101 = vmatprep.subr.mxu0 0.0
    %102 = vmatpush1.msra.mxu0 0.0
    %103 = vmatprep.subr.mxu0 0.0
    %104 = vmatpush1.msra.mxu0 0.0
    %105 = vmatprep.subr.mxu0 0.0
    %106 = vmatpush1.msra.mxu0 0.0
    %107 = vmatprep.subr.mxu0 0.0
    %108 = vmatpush1.msra.mxu0 0.0
    %109 = vmatprep.subr.mxu0 0.0
    %110 = vmatpush1.msra.mxu0 %v77
    %111 = vmatprep.subr.mxu0 0.0
    %112 = vmatpush1.msra.mxu0 %v76
    %113 = vmatprep.subr.mxu0 0.0
    %114 = vmatpush1.msra.mxu0 %v75
    %115 = vmatprep.subr.mxu0 0.0
    %116 = vmatpush1.msra.mxu0 %v74
    %117 = vmatprep.subr.mxu0 0.0
    %118 = vmatpush2.msra.mxu0 0.0
    %119 = vmatprep.subr.mxu0 0.0
    %120 = vmatpush2.msra.mxu0 0.0
    %121 = vmatprep.subr.mxu0 0.0
    %122 = vmatpush2.msra.mxu0 0.0
    %123 = vmatprep.subr.mxu0 0.0
    %124 = vmatpush2.msra.mxu0 0.0
    %125 = vmatprep.subr.mxu0 0.0
    %126 = vmatpush2.msra.mxu0 0.0
    %127 = vmatprep.subr.mxu0 0.0
    %128 = vmatpush2.msra.mxu0 0.0
    %129 = vmatprep.subr.mxu0 0.0
    %130 = vmatpush2.msra.mxu0 0.0
    %131 = vmatprep.subr.mxu0 0.0
    %132 = vmatpush2.msra.mxu0 0.0
    %133 = vmatprep.subr.mxu0 0.0
    %134 = vmatpush2.msra.mxu0 0.0
    %135 = vmatprep.subr.mxu0 0.0
    %136 = vmatpush2.msra.mxu0 0.0
    %137 = vmatprep.subr.mxu0 0.0
    %138 = vmatpush2.msra.mxu0 0.0
    %139 = vmatprep.subr.mxu0 0.0
    %140 = vmatpush2.msra.mxu0 0.0
    %141 = vmatprep.subr.mxu0 0.0
    %142 = vmatpush2.msra.mxu0 0.0
    %143 = vmatprep.subr.mxu0 0.0
    %144 = vmatpush2.msra.mxu0 0.0
    %145 = vmatprep.subr.mxu0 0.0
    %146 = vmatpush2.msra.mxu0 0.0
    %147 = vmatprep.subr.mxu0 0.0
    %148 = vmatpush2.msra.mxu0 0.0
    %149 = vmatprep.mubr.f32.mxu0 0.0
    %150 = vmatmul.mubr.f32.gmra.mxu0 %v80
    %v151 = vpop.f32.mrf.mxu0
    %v152 = vadd.f32 0.0, %v151
    %v153 = vpop.f32.mrf.mxu0
    %154 = vmatprep.mubr.f32.mxu0 0.0
    %155 = vmatmul.mubr.f32.gmra.mxu0 %v83
    %v156 = vpop.f32.mrf.mxu0
    %v157 = vadd.f32 0.0, %v156
    %v158 = vpop.f32.mrf.mxu0
    %159 = vdwg.mxu0
    %v160 = vld [vmem:[#allocation8] sm:$0xff]
    %v161 = vld [vmem:[#allocation8 + $0x8] sm:$0xff]
    %v162 = vld [vmem:[#allocation5] sm:$0xff]
    %v163 = vld [vmem:[#allocation5 + $0x8] sm:$0xff]
    %vm164 = vcmask 64512
    %v166 = vsel %vm164, %v162, 0
    %168 = vmatprep.subr.mxu0 0.0
    %169 = vmatpush1.msra.mxu0 0.0
    %170 = vmatprep.subr.mxu0 0.0
    %171 = vmatpush1.msra.mxu0 0.0
    %172 = vmatprep.subr.mxu0 0.0
    %173 = vmatpush1.msra.mxu0 0.0
    %174 = vmatprep.subr.mxu0 0.0
    %175 = vmatpush1.msra.mxu0 0.0
    %176 = vmatprep.subr.mxu0 0.0
    %177 = vmatpush1.msra.mxu0 0.0
    %178 = vmatprep.subr.mxu0 0.0
    %179 = vmatpush1.msra.mxu0 0.0
    %180 = vmatprep.subr.mxu0 0.0
    %181 = vmatpush1.msra.mxu0 0.0
    %182 = vmatprep.subr.mxu0 0.0
    %183 = vmatpush1.msra.mxu0 0.0
    %184 = vmatprep.subr.mxu0 0.0
    %185 = vmatpush1.msra.mxu0 0.0
    %186 = vmatprep.subr.mxu0 0.0
    %187 = vmatpush1.msra.mxu0 0.0
    %188 = vmatprep.subr.mxu0 0.0
    %189 = vmatpush1.msra.mxu0 0.0
    %190 = vmatprep.subr.mxu0 0.0
    %191 = vmatpush1.msra.mxu0 0.0
    %192 = vmatprep.subr.mxu0 0.0
    %193 = vmatpush1.msra.mxu0 0.0
    %194 = vmatprep.subr.mxu0 0.0
    %195 = vmatpush1.msra.mxu0 0.0
    %196 = vmatprep.subr.mxu0 0.0
    %197 = vmatpush1.msra.mxu0 0.0
    %198 = vmatprep.subr.mxu0 0.0
    %199 = vmatpush1.msra.mxu0 %v152
    %200 = vmatprep.subr.mxu0 0.0
    %201 = vmatpush2.msra.mxu0 0.0
    %202 = vmatprep.subr.mxu0 0.0
    %203 = vmatpush2.msra.mxu0 0.0
    %204 = vmatprep.subr.mxu0 0.0
    %205 = vmatpush2.msra.mxu0 0.0
    %206 = vmatprep.subr.mxu0 0.0
    %207 = vmatpush2.msra.mxu0 0.0
    %208 = vmatprep.subr.mxu0 0.0
    %209 = vmatpush2.msra.mxu0 0.0
    %210 = vmatprep.subr.mxu0 0.0
    %211 = vmatpush2.msra.mxu0 0.0
    %212 = vmatprep.subr.mxu0 0.0
    %213 = vmatpush2.msra.mxu0 0.0
    %214 = vmatprep.subr.mxu0 0.0
    %215 = vmatpush2.msra.mxu0 0.0
    %216 = vmatprep.subr.mxu0 0.0
    %217 = vmatpush2.msra.mxu0 0.0
    %218 = vmatprep.subr.mxu0 0.0
    %219 = vmatpush2.msra.mxu0 0.0
    %220 = vmatprep.subr.mxu0 0.0
    %221 = vmatpush2.msra.mxu0 0.0
    %222 = vmatprep.subr.mxu0 0.0
    %223 = vmatpush2.msra.mxu0 0.0
    %224 = vmatprep.subr.mxu0 0.0
    %225 = vmatpush2.msra.mxu0 0.0
    %226 = vmatprep.subr.mxu0 0.0
    %227 = vmatpush2.msra.mxu0 0.0
    %228 = vmatprep.subr.mxu0 0.0
    %229 = vmatpush2.msra.mxu0 0.0
    %230 = vmatprep.subr.mxu0 0.0
    %231 = vmatpush2.msra.mxu0 0.0
    %232 = vmatprep.mubr.f32.mxu0 0.0
    %233 = vmatmul.mubr.f32.gmra.mxu0 %v166
    %v234 = vpop.f32.mrf.mxu0
    %v235 = vadd.f32 0.0, %v234
    %v236 = vpop.f32.mrf.mxu0
    %237 = vdwg.mxu0
    %v239 = vsel %vm164, %v163, 0
    %241 = vmatprep.subr.mxu0 0.0
    %242 = vmatpush1.msra.mxu0 0.0
    %243 = vmatprep.subr.mxu0 0.0
    %244 = vmatpush1.msra.mxu0 0.0
    %245 = vmatprep.subr.mxu0 0.0
    %246 = vmatpush1.msra.mxu0 0.0
    %247 = vmatprep.subr.mxu0 0.0
    %248 = vmatpush1.msra.mxu0 0.0
    %249 = vmatprep.subr.mxu0 0.0
    %250 = vmatpush1.msra.mxu0 0.0
    %251 = vmatprep.subr.mxu0 0.0
    %252 = vmatpush1.msra.mxu0 0.0
    %253 = vmatprep.subr.mxu0 0.0
    %254 = vmatpush1.msra.mxu0 0.0
    %255 = vmatprep.subr.mxu0 0.0
    %256 = vmatpush1.msra.mxu0 0.0
    %257 = vmatprep.subr.mxu0 0.0
    %258 = vmatpush1.msra.mxu0 0.0
    %259 = vmatprep.subr.mxu0 0.0
    %260 = vmatpush1.msra.mxu0 0.0
    %261 = vmatprep.subr.mxu0 0.0
    %262 = vmatpush1.msra.mxu0 0.0
    %263 = vmatprep.subr.mxu0 0.0
    %264 = vmatpush1.msra.mxu0 0.0
    %265 = vmatprep.subr.mxu0 0.0
    %266 = vmatpush1.msra.mxu0 0.0
    %267 = vmatprep.subr.mxu0 0.0
    %268 = vmatpush1.msra.mxu0 0.0
    %269 = vmatprep.subr.mxu0 0.0
    %270 = vmatpush1.msra.mxu0 0.0
    %271 = vmatprep.subr.mxu0 0.0
    %272 = vmatpush1.msra.mxu0 %v157
    %273 = vmatprep.subr.mxu0 0.0
    %274 = vmatpush2.msra.mxu0 0.0
    %275 = vmatprep.subr.mxu0 0.0
    %276 = vmatpush2.msra.mxu0 0.0
    %277 = vmatprep.subr.mxu0 0.0
    %278 = vmatpush2.msra.mxu0 0.0
    %279 = vmatprep.subr.mxu0 0.0
    %280 = vmatpush2.msra.mxu0 0.0
    %281 = vmatprep.subr.mxu0 0.0
    %282 = vmatpush2.msra.mxu0 0.0
    %283 = vmatprep.subr.mxu0 0.0
    %284 = vmatpush2.msra.mxu0 0.0
    %285 = vmatprep.subr.mxu0 0.0
    %286 = vmatpush2.msra.mxu0 0.0
    %287 = vmatprep.subr.mxu0 0.0
    %288 = vmatpush2.msra.mxu0 0.0
    %289 = vmatprep.subr.mxu0 0.0
    %290 = vmatpush2.msra.mxu0 0.0
    %291 = vmatprep.subr.mxu0 0.0
    %292 = vmatpush2.msra.mxu0 0.0
    %293 = vmatprep.subr.mxu0 0.0
    %294 = vmatpush2.msra.mxu0 0.0
    %295 = vmatprep.subr.mxu0 0.0
    %296 = vmatpush2.msra.mxu0 0.0
    %297 = vmatprep.subr.mxu0 0.0
    %298 = vmatpush2.msra.mxu0 0.0
    %299 = vmatprep.subr.mxu0 0.0
    %300 = vmatpush2.msra.mxu0 0.0
    %301 = vmatprep.subr.mxu0 0.0
    %302 = vmatpush2.msra.mxu0 0.0
    %303 = vmatprep.subr.mxu0 0.0
    %304 = vmatpush2.msra.mxu0 0.0
    %305 = vmatprep.mubr.f32.mxu0 0.0
    %306 = vmatmul.mubr.f32.gmra.mxu0 %v239
    %v307 = vpop.f32.mrf.mxu0
    %v308 = vadd.f32 0.0, %v307
    %v309 = vpop.f32.mrf.mxu0
    %310 = vdwg.mxu0
    %v311 = vadd.f32 %v160, %v235
    %v312 = vadd.f32 %v161, %v308
    %313 = vst [vmem:[#allocation8] sm:$0xff] %v311
    %314 = vst [vmem:[#allocation8 + $0x8] sm:$0xff] %v312
    // Predicated region
    $region34: #{tpu_custom_call.1} parent=1 // pred_check
      _
    $region35: #{tpu_custom_call.1} parent=1 // pred_check_branch
      %316 = sbr.rel (0) target = $region37
    $region36: #{tpu_custom_call.1} parent=1 // pred_region
      %s318 = ssub.s32 256, 256
      %319 = vsyncadd [#allocation4], %s318
      %s320 = sshll.u32 [#allocation8], 4
      %s321 = int_to_ptr.vmem [resolvable:$true] %s320
      %326 = dma.vmem_to_hbm [thread:$0]  %s321, 256, %s4, [#allocation4], 128, 128, 8
    $region37: #{tpu_custom_call.1} parent=1 // pred_fallthru
      _
    // Predicated region
    $region38: #{tpu_custom_call.1} parent=1 // pred_check
      _
    $region39: #{tpu_custom_call.1} parent=1 // pred_check_branch
      %328 = sbr.rel (0) target = $region41
    $region40: #{tpu_custom_call.1} parent=1 // pred_region
      %329 = dma.done [#allocation4], 256
    $region41: #{tpu_custom_call.1} parent=1 // pred_fallthru
      _
    %330 = vsyncpa [#allocation3], 1
    %331 = vsyncpa [#allocation6], 1
    %332 = vsyncpa [#allocation4], 1

// kernel: tpu_custom_call.1
$region0: #{tpu_custom_call.1}
  #allocation0 [shape = 'u32[]', space=smem, size = 0x4, offset = 0x4, fixed_abs, tag = 'smem constant byte address 0x4 - core index']
  #allocation1 [shape = 'u32[144,128]{1,0:T(1,128)}', space=vmem, size = 0x12000, scoped, tag = 'internal scratch']
  %s0 = inlined_call_operand.hbm [shape: f32[2,8,32], index: 0, kind: input, shape index: {}]
  %s1 = inlined_call_operand.hbm [shape: f32[2,8,8], index: 1, kind: input, shape index: {}]
  %s2 = inlined_call_operand.hbm [shape: f32[32,128], index: 2, kind: input, shape index: {}]
  %s3 = inlined_call_operand.vmem [shape: f32[1,128], index: 3, kind: input, shape index: {}]
  %s4 = inlined_call_operand.hbm [shape: f32[2,8,128], index: 4, kind: output, shape index: {}]
  %s5 = sld [smem:[#allocation0]]
  $region42: #{tpu_custom_call.1} parent=0
    _
  %s7 = ssub.s32 1, %s5
  %s8 = scalar_select 0, %s7, %s5
  $region1: #{tpu_custom_call.1} parent=0
    #allocation2 [shape = 'u8[8192]{0}', space=vmem, size = 0x2000, scoped, tag = 'input window, operand 0, single buffered']
    #allocation3 [shape = 's32[1]{0}', space=sflag, size = 0x4, scoped, tag = 'scoped memory for tpu_custom_call.1']
    #allocation4 [shape = 's32[1]{0}', space=sflag, size = 0x4, scoped, tag = 'scoped memory for tpu_custom_call.1']
    #allocation5 [shape = 'u8[8192]{0}', space=vmem, size = 0x2000, scoped, tag = 'input window, operand 1, single buffered']
    #allocation6 [shape = 's32[1]{0}', space=sflag, size = 0x4, scoped, tag = 'scoped memory for tpu_custom_call.1']
    #allocation7 [shape = 'u8[16384]{0}', space=vmem, size = 0x4000, scoped, tag = 'input window, operand 2, single buffered']
    #allocation8 [shape = 'u8[8192]{0}', space=vmem, size = 0x2000, scoped, tag = 'output window, operand 0, single buffered']
    %9 = vsyncpa [#allocation3], 0
    %10 = vsyncpa [#allocation6], 0
    %11 = vsyncpa [#allocation4], 0
    // Predicated region
    $region2: #{tpu_custom_call.1} parent=1 // pred_check
      _
    $region3: #{tpu_custom_call.1} parent=1 // pred_check_branch
      %13 = sbr.rel (0) target = $region5
    $region4: #{tpu_custom_call.1} parent=1 // pred_region
      %s15 = ssub.s32 256, 256
      %16 = vsyncadd [#allocation3], %s15
      %s17 = sshll.u32 [#allocation2], 4
      %s18 = int_to_ptr.vmem [resolvable:$true] %s17
      %23 = dma.hbm_to_vmem [thread:$0]  %s0, 256, %s18, [#allocation3], 128, 128, 8
    $region5: #{tpu_custom_call.1} parent=1 // pred_fallthru
      _
    // Predicated region
    $region6: #{tpu_custom_call.1} parent=1 // pred_check
      _
    $region7: #{tpu_custom_call.1} parent=1 // pred_check_branch
      %25 = sbr.rel (0) target = $region9
    $region8: #{tpu_custom_call.1} parent=1 // pred_region
      %s27 = ssub.s32 256, 256
      %28 = vsyncadd [#allocation6], %s27
      %s29 = sshll.u32 [#allocation5], 4
      %s30 = int_to_ptr.vmem [resolvable:$true] %s29
      %35 = dma.hbm_to_vmem [thread:$0]  %s1, 256, %s30, [#allocation6], 128, 128, 8
    $region9: #{tpu_custom_call.1} parent=1 // pred_fallthru
      _
    // Predicated region
    $region10: #{tpu_custom_call.1} parent=1 // pred_check
      _
    $region11: #{tpu_custom_call.1} parent=1 // pred_check_branch
      %37 = sbr.rel (0) target = $region13
    $region12: #{tpu_custom_call.1} parent=1 // pred_region
      %s39 = ssub.s32 512, 512
      %40 = vsyncadd [#allocation6], %s39
      %s41 = sshll.u32 [#allocation7], 4
      %s42 = int_to_ptr.vmem [resolvable:$true] %s41
      %47 = dma.hbm_to_vmem [thread:$0]  %s2, 512, %s42, [#allocation6], 128, 128, 8
    $region13: #{tpu_custom_call.1} parent=1 // pred_fallthru
      _
    // Predicated region
    $region14: #{tpu_custom_call.1} parent=1 // pred_check
      _
    $region15: #{tpu_custom_call.1} parent=1 // pred_check_branch
      %49 = sbr.rel (0) target = $region17
    $region16: #{tpu_custom_call.1} parent=1 // pred_region
      _
    $region17: #{tpu_custom_call.1} parent=1 // pred_fallthru
      _
    // Predicated region
    $region18: #{tpu_custom_call.1} parent=1 // pred_check
      _
    $region19: #{tpu_custom_call.1} parent=1 // pred_check_branch
      %51 = sbr.rel (0) target = $region21
    $region20: #{tpu_custom_call.1} parent=1 // pred_region
      %52 = dma.done [#allocation3], 256
    $region21: #{tpu_custom_call.1} parent=1 // pred_fallthru
      _
    // Predicated region
    $region22: #{tpu_custom_call.1} parent=1 // pred_check
      _
    $region23: #{tpu_custom_call.1} parent=1 // pred_check_branch
      %54 = sbr.rel (0) target = $region25
    $region24: #{tpu_custom_call.1} parent=1 // pred_region
      %55 = dma.done [#allocation6], 256
    $region25: #{tpu_custom_call.1} parent=1 // pred_fallthru
      _
    // Predicated region
    $region26: #{tpu_custom_call.1} parent=1 // pred_check
      _
    $region27: #{tpu_custom_call.1} parent=1 // pred_check_branch
      %57 = sbr.rel (0) target = $region29
    $region28: #{tpu_custom_call.1} parent=1 // pred_region
      %58 = dma.done [#allocation6], 512
    $region29: #{tpu_custom_call.1} parent=1 // pred_fallthru
      _
    %p59 = scmp.eq.s32.totalorder 0, 0
    // Predicated region
    $region30: #{tpu_custom_call.1} parent=1 // pred_check
      %p60 = pneg %p59
    $region31: #{tpu_custom_call.1} parent=1 // pred_check_branch
      %62 = sbr.rel (%p60) target = $region33
    $region32: #{tpu_custom_call.1} parent=1 // pred_region
      %v63 = vld [vmem:[%s3] sm:$0x1]
      %v65 = vlaneseq
      %v66 = vshrl.u32 %v65, 7
      %v67 = vsub.s32 0, %v66
      %v68 = vrot.slane %v63, %v67
      %70 = vst [vmem:[#allocation8] sm:$0xff] %v68
      %71 = vst [vmem:[#allocation8 + $0x8] sm:$0xff] %v68
    $region33: #{tpu_custom_call.1} parent=1 // pred_fallthru
      _
    %v72 = vld [vmem:[#allocation2] sm:$0xff]
    %v73 = vld [vmem:[#allocation2 + $0x8] sm:$0xff]
    %v74 = vld [vmem:[#allocation7] sm:$0xff]
    %v75 = vld [vmem:[#allocation7 + $0x8] sm:$0xff]
    %v76 = vld [vmem:[#allocation7 + $0x10] sm:$0xff]
    %v77 = vld [vmem:[#allocation7 + $0x18] sm:$0xff]
    %vm78 = vcmask 261120
    %v80 = vsel %vm78, %v72, 0
    %v83 = vsel %vm78, %v73, 0
    %85 = vmatprep.subr.mxu0 0.0
    %86 = vmatpush1.msra.mxu0 0.0
    %87 = vmatprep.subr.mxu0 0.0
    %88 = vmatpush1.msra.mxu0 0.0
    %89 = vmatprep.subr.mxu0 0.0
    %90 = vmatpush1.msra.mxu0 0.0
    %91 = vmatprep.subr.mxu0 0.0
    %92 = vmatpush1.msra.mxu0 0.0
    %93 = vmatprep.subr.mxu0 0.0
    %94 = vmatpush1.msra.mxu0 0.0
    %95 = vmatprep.subr.mxu0 0.0
    %96 = vmatpush1.msra.mxu0 0.0
    %97 = vmatprep.subr.mxu0 0.0
    %98 = vmatpush1.msra.mxu0 0.0
    %99 = vmatprep.subr.mxu0 0.0
    %100 = vmatpush1.msra.mxu0 0.0
    %101 = vmatprep.subr.mxu0 0.0
    %102 = vmatpush1.msra.mxu0 0.0
    %103 = vmatprep.subr.mxu0 0.0
    %104 = vmatpush1.msra.mxu0 0.0
    %105 = vmatprep.subr.mxu0 0.0
    %106 = vmatpush1.msra.mxu0 0.0
    %107 = vmatprep.subr.mxu0 0.0
    %108 = vmatpush1.msra.mxu0 0.0
    %109 = vmatprep.subr.mxu0 0.0
    %110 = vmatpush1.msra.mxu0 %v77
    %111 = vmatprep.subr.mxu0 0.0
    %112 = vmatpush1.msra.mxu0 %v76
    %113 = vmatprep.subr.mxu0 0.0
    %114 = vmatpush1.msra.mxu0 %v75
    %115 = vmatprep.subr.mxu0 0.0
    %116 = vmatpush1.msra.mxu0 %v74
    %117 = vmatprep.subr.mxu0 0.0
    %118 = vmatpush2.msra.mxu0 0.0
    %119 = vmatprep.subr.mxu0 0.0
    %120 = vmatpush2.msra.mxu0 0.0
    %121 = vmatprep.subr.mxu0 0.0
    %122 = vmatpush2.msra.mxu0 0.0
    %123 = vmatprep.subr.mxu0 0.0
    %124 = vmatpush2.msra.mxu0 0.0
    %125 = vmatprep.subr.mxu0 0.0
    %126 = vmatpush2.msra.mxu0 0.0
    %127 = vmatprep.subr.mxu0 0.0
    %128 = vmatpush2.msra.mxu0 0.0
    %129 = vmatprep.subr.mxu0 0.0
    %130 = vmatpush2.msra.mxu0 0.0
    %131 = vmatprep.subr.mxu0 0.0
    %132 = vmatpush2.msra.mxu0 0.0
    %133 = vmatprep.subr.mxu0 0.0
    %134 = vmatpush2.msra.mxu0 0.0
    %135 = vmatprep.subr.mxu0 0.0
    %136 = vmatpush2.msra.mxu0 0.0
    %137 = vmatprep.subr.mxu0 0.0
    %138 = vmatpush2.msra.mxu0 0.0
    %139 = vmatprep.subr.mxu0 0.0
    %140 = vmatpush2.msra.mxu0 0.0
    %141 = vmatprep.subr.mxu0 0.0
    %142 = vmatpush2.msra.mxu0 0.0
    %143 = vmatprep.subr.mxu0 0.0
    %144 = vmatpush2.msra.mxu0 0.0
    %145 = vmatprep.subr.mxu0 0.0
    %146 = vmatpush2.msra.mxu0 0.0
    %147 = vmatprep.subr.mxu0 0.0
    %148 = vmatpush2.msra.mxu0 0.0
    %149 = vmatprep.mubr.f32.mxu0 0.0
    %150 = vmatmul.mubr.f32.gmra.mxu0 %v80
    %v151 = vpop.f32.mrf.mxu0
    %v152 = vadd.f32 0.0, %v151
    %v153 = vpop.f32.mrf.mxu0
    %154 = vmatprep.mubr.f32.mxu0 0.0
    %155 = vmatmul.mubr.f32.gmra.mxu0 %v83
    %v156 = vpop.f32.mrf.mxu0
    %v157 = vadd.f32 0.0, %v156
    %v158 = vpop.f32.mrf.mxu0
    %159 = vdwg.mxu0
    %v160 = vld [vmem:[#allocation8] sm:$0xff]
    %v161 = vld [vmem:[#allocation8 + $0x8] sm:$0xff]
    %v162 = vld [vmem:[#allocation5] sm:$0xff]
    %v163 = vld [vmem:[#allocation5 + $0x8] sm:$0xff]
    %vm164 = vcmask 64512
    %v166 = vsel %vm164, %v162, 0
    %168 = vmatprep.subr.mxu0 0.0
    %169 = vmatpush1.msra.mxu0 0.0
    %170 = vmatprep.subr.mxu0 0.0
    %171 = vmatpush1.msra.mxu0 0.0
    %172 = vmatprep.subr.mxu0 0.0
    %173 = vmatpush1.msra.mxu0 0.0
    %174 = vmatprep.subr.mxu0 0.0
    %175 = vmatpush1.msra.mxu0 0.0
    %176 = vmatprep.subr.mxu0 0.0
    %177 = vmatpush1.msra.mxu0 0.0
    %178 = vmatprep.subr.mxu0 0.0
    %179 = vmatpush1.msra.mxu0 0.0
    %180 = vmatprep.subr.mxu0 0.0
    %181 = vmatpush1.msra.mxu0 0.0
    %182 = vmatprep.subr.mxu0 0.0
    %183 = vmatpush1.msra.mxu0 0.0
    %184 = vmatprep.subr.mxu0 0.0
    %185 = vmatpush1.msra.mxu0 0.0
    %186 = vmatprep.subr.mxu0 0.0
    %187 = vmatpush1.msra.mxu0 0.0
    %188 = vmatprep.subr.mxu0 0.0
    %189 = vmatpush1.msra.mxu0 0.0
    %190 = vmatprep.subr.mxu0 0.0
    %191 = vmatpush1.msra.mxu0 0.0
    %192 = vmatprep.subr.mxu0 0.0
    %193 = vmatpush1.msra.mxu0 0.0
    %194 = vmatprep.subr.mxu0 0.0
    %195 = vmatpush1.msra.mxu0 0.0
    %196 = vmatprep.subr.mxu0 0.0
    %197 = vmatpush1.msra.mxu0 0.0
    %198 = vmatprep.subr.mxu0 0.0
    %199 = vmatpush1.msra.mxu0 %v152
    %200 = vmatprep.subr.mxu0 0.0
    %201 = vmatpush2.msra.mxu0 0.0
    %202 = vmatprep.subr.mxu0 0.0
    %203 = vmatpush2.msra.mxu0 0.0
    %204 = vmatprep.subr.mxu0 0.0
    %205 = vmatpush2.msra.mxu0 0.0
    %206 = vmatprep.subr.mxu0 0.0
    %207 = vmatpush2.msra.mxu0 0.0
    %208 = vmatprep.subr.mxu0 0.0
    %209 = vmatpush2.msra.mxu0 0.0
    %210 = vmatprep.subr.mxu0 0.0
    %211 = vmatpush2.msra.mxu0 0.0
    %212 = vmatprep.subr.mxu0 0.0
    %213 = vmatpush2.msra.mxu0 0.0
    %214 = vmatprep.subr.mxu0 0.0
    %215 = vmatpush2.msra.mxu0 0.0
    %216 = vmatprep.subr.mxu0 0.0
    %217 = vmatpush2.msra.mxu0 0.0
    %218 = vmatprep.subr.mxu0 0.0
    %219 = vmatpush2.msra.mxu0 0.0
    %220 = vmatprep.subr.mxu0 0.0
    %221 = vmatpush2.msra.mxu0 0.0
    %222 = vmatprep.subr.mxu0 0.0
    %223 = vmatpush2.msra.mxu0 0.0
    %224 = vmatprep.subr.mxu0 0.0
    %225 = vmatpush2.msra.mxu0 0.0
    %226 = vmatprep.subr.mxu0 0.0
    %227 = vmatpush2.msra.mxu0 0.0
    %228 = vmatprep.subr.mxu0 0.0
    %229 = vmatpush2.msra.mxu0 0.0
    %230 = vmatprep.subr.mxu0 0.0
    %231 = vmatpush2.msra.mxu0 0.0
    %232 = vmatprep.mubr.f32.mxu0 0.0
    %233 = vmatmul.mubr.f32.gmra.mxu0 %v166
    %v234 = vpop.f32.mrf.mxu0
    %v235 = vadd.f32 0.0, %v234
    %v236 = vpop.f32.mrf.mxu0
    %237 = vdwg.mxu0
    %v239 = vsel %vm164, %v163, 0
    %241 = vmatprep.subr.mxu0 0.0
    %242 = vmatpush1.msra.mxu0 0.0
    %243 = vmatprep.subr.mxu0 0.0
    %244 = vmatpush1.msra.mxu0 0.0
    %245 = vmatprep.subr.mxu0 0.0
    %246 = vmatpush1.msra.mxu0 0.0
    %247 = vmatprep.subr.mxu0 0.0
    %248 = vmatpush1.msra.mxu0 0.0
    %249 = vmatprep.subr.mxu0 0.0
    %250 = vmatpush1.msra.mxu0 0.0
    %251 = vmatprep.subr.mxu0 0.0
    %252 = vmatpush1.msra.mxu0 0.0
    %253 = vmatprep.subr.mxu0 0.0
    %254 = vmatpush1.msra.mxu0 0.0
    %255 = vmatprep.subr.mxu0 0.0
    %256 = vmatpush1.msra.mxu0 0.0
    %257 = vmatprep.subr.mxu0 0.0
    %258 = vmatpush1.msra.mxu0 0.0
    %259 = vmatprep.subr.mxu0 0.0
    %260 = vmatpush1.msra.mxu0 0.0
    %261 = vmatprep.subr.mxu0 0.0
    %262 = vmatpush1.msra.mxu0 0.0
    %263 = vmatprep.subr.mxu0 0.0
    %264 = vmatpush1.msra.mxu0 0.0
    %265 = vmatprep.subr.mxu0 0.0
    %266 = vmatpush1.msra.mxu0 0.0
    %267 = vmatprep.subr.mxu0 0.0
    %268 = vmatpush1.msra.mxu0 0.0
    %269 = vmatprep.subr.mxu0 0.0
    %270 = vmatpush1.msra.mxu0 0.0
    %271 = vmatprep.subr.mxu0 0.0
    %272 = vmatpush1.msra.mxu0 %v157
    %273 = vmatprep.subr.mxu0 0.0
    %274 = vmatpush2.msra.mxu0 0.0
    %275 = vmatprep.subr.mxu0 0.0
    %276 = vmatpush2.msra.mxu0 0.0
    %277 = vmatprep.subr.mxu0 0.0
    %278 = vmatpush2.msra.mxu0 0.0
    %279 = vmatprep.subr.mxu0 0.0
    %280 = vmatpush2.msra.mxu0 0.0
    %281 = vmatprep.subr.mxu0 0.0
    %282 = vmatpush2.msra.mxu0 0.0
    %283 = vmatprep.subr.mxu0 0.0
    %284 = vmatpush2.msra.mxu0 0.0
    %285 = vmatprep.subr.mxu0 0.0
    %286 = vmatpush2.msra.mxu0 0.0
    %287 = vmatprep.subr.mxu0 0.0
    %288 = vmatpush2.msra.mxu0 0.0
    %289 = vmatprep.subr.mxu0 0.0
    %290 = vmatpush2.msra.mxu0 0.0
    %291 = vmatprep.subr.mxu0 0.0
    %292 = vmatpush2.msra.mxu0 0.0
    %293 = vmatprep.subr.mxu0 0.0
    %294 = vmatpush2.msra.mxu0 0.0
    %295 = vmatprep.subr.mxu0 0.0
    %296 = vmatpush2.msra.mxu0 0.0
    %297 = vmatprep.subr.mxu0 0.0
    %298 = vmatpush2.msra.mxu0 0.0
    %299 = vmatprep.subr.mxu0 0.0
    %300 = vmatpush2.msra.mxu0 0.0
    %301 = vmatprep.subr.mxu0 0.0
    %302 = vmatpush2.msra.mxu0 0.0
    %303 = vmatprep.subr.mxu0 0.0
    %304 = vmatpush2.msra.mxu0 0.0
    %305 = vmatprep.mubr.f32.mxu0 0.0
    %306 = vmatmul.mubr.f32.gmra.mxu0 %v239
    %v307 = vpop.f32.mrf.mxu0
    %v308 = vadd.f32 0.0, %v307
    %v309 = vpop.f32.mrf.mxu0
    %310 = vdwg.mxu0
    %v311 = vadd.f32 %v160, %v235
    %v312 = vadd.f32 %v161, %v308
    %313 = vst [vmem:[#allocation8] sm:$0xff] %v311
    %314 = vst [vmem:[#allocation8 + $0x8] sm:$0xff] %v312
    // Predicated region
    $region34: #{tpu_custom_call.1} parent=1 // pred_check
      _
    $region35: #{tpu_custom_call.1} parent=1 // pred_check_branch
      %316 = sbr.rel (0) target = $region37
    $region36: #{tpu_custom_call.1} parent=1 // pred_region
      %s318 = ssub.s32 256, 256
      %319 = vsyncadd [#allocation4], %s318
      %s320 = sshll.u32 [#allocation8], 4
      %s321 = int_to_ptr.vmem [resolvable:$true] %s320
      %326 = dma.vmem_to_hbm [thread:$0]  %s321, 256, %s4, [#allocation4], 128, 128, 8
    $region37: #{tpu_custom_call.1} parent=1 // pred_fallthru
      _
    // Predicated region
    $region38: #{tpu_custom_call.1} parent=1 // pred_check
      _
    $region39: #{tpu_custom_call.1} parent=1 // pred_check_branch
      %328 = sbr.rel (0) target = $region41
    $region40: #{tpu_custom_call.1} parent=1 // pred_region
      %329 = dma.done [#allocation4], 256
    $region41: #{tpu_custom_call.1} parent=1 // pred_fallthru
      _
    %330 = vsyncpa [#allocation3], 1
    %331 = vsyncpa [#allocation6], 1
    %332 = vsyncpa [#allocation4], 1

</llo_original>
